<compile_context>
chip_gen: v7x
topology: tpu7x:2x2x1
jax: 0.10.0
libtpu: 0.0.40
codegen_flags: <defaults>
</compile_context>

<pallas_src>
import numpy as np
import jax
import jax.numpy as jnp
from jax.experimental import pallas as pl
from jax.experimental.pallas import tpu as pltpu

_LANE = 128
_UNROLL_CAP = 16            # max statically unrolled slab copies per block
_DEFAULT_MIN_BYTES = 1 << 20  # below this, XLA's copy beats kernel launch overhead

_BUDGET_CACHE = None


def _block_budget_bytes():
    """(target_block_bytes, max_block_bytes), chip-aware with a safe fallback."""
    global _BUDGET_CACHE
    if _BUDGET_CACHE is None:
        target, cap = 4 << 20, 8 << 20            # safe for v7x (64 MiB VMEM)
        try:
            vmem = int(getattr(pltpu.get_tpu_info(), "vmem_capacity_bytes", 0))
            if vmem >= (100 << 20):               # v5e / v6e: 128 MiB physical VMEM
                target, cap = 6 << 20, 12 << 20
        except Exception:
            pass
        _BUDGET_CACHE = (target, cap)
    return _BUDGET_CACHE


def _divisors(n):
    small, large = [], []
    d = 1
    while d * d <= n:
        if n % d == 0:
            small.append(d)
            if d != n // d:
                large.append(n // d)
        d += 1
    return small + large[::-1]  # ascending


def _largest_divisor(n, cap, pred):
    best = None
    for d in _divisors(n):
        if d <= cap and pred(d):
            best = d
    return best


def _smallest_divisor(n, pred):
    for d in _divisors(n):
        if pred(d):
            return d
    return n


# --------------------------------------------------------------------------- kernels

def _make_slab_swap_kernel(At, Bt, Q):
    # x_ref: (At, Mt, Bt*Q)  ->  o_ref: (Bt, Mt, At*Q), with Q % 128 == 0.
    if At == 1 and Bt == 1:
        def kernel(x_ref, o_ref):
            o_ref[...] = x_ref[...]          # pure-DMA form: single whole-block copy
        return kernel

    def kernel(x_ref, o_ref):
        # <= _UNROLL_CAP statically-unrolled, lane-aligned whole-(Mt, Q) slab copies.
        for aa in range(At):
            for bb in range(Bt):
                o_ref[bb, :, aa * Q:(aa + 1) * Q] = x_ref[aa, :, bb * Q:(bb + 1) * Q]
    return kernel


def _transpose2d_kernel(x_ref, o_ref):
    # x_ref: (At, Bt) -> o_ref: (Bt, At): dense 2-D minor-dims transpose (XLU unit).
    o_ref[...] = jnp.swapaxes(x_ref[...], 0, 1)


# ------------------------------------------------------------------------- strategies

def _transpose_lane_folded(x, out_shape, P, A, M, B, Q, itemsize, sub,
                           tgt_bytes, max_bytes, total_bytes):
    """Q % 128 == 0: DMA-driven A<->B permutation with lane-aligned slab copies."""
    budget = max(1, tgt_bytes // itemsize)

    # Mt: second-minor dim of both views -> multiple of the dtype sublane pack or full.
    mt_cap = max(1, budget // Q)
    Mt = _largest_divisor(M, mt_cap, lambda t: t % sub == 0 or t == M)
    if Mt is None:
        Mt = _smallest_divisor(M, lambda t: t % sub == 0 or t == M)

    # Grow At/Bt (no layout constraints on them) so each grid step moves enough data
    # to amortize the ~0.35us per-step overhead, keeping the unroll bounded.
    rem = max(1, budget // (Mt * Q))
    At = _largest_divisor(A, min(_UNROLL_CAP, rem), lambda t: True) or 1
    Bt = _largest_divisor(B, max(1, min(_UNROLL_CAP // At, rem // At)),
                          lambda t: True) or 1

    block_bytes = At * Bt * Mt * Q * itemsize
    if block_bytes > max_bytes:
        return None   # irregular shape: no legal tiling fits VMEM -> let XLA handle it

    x4 = x.reshape(P, A, M, B * Q)
    grid = (P, A // At, B // Bt, M // Mt)
    in_spec = pl.BlockSpec((None, At, Mt, Bt * Q),
                           lambda p, ia, ib, im: (p, ia, im, ib))
    out_spec = pl.BlockSpec((None, Bt, Mt, At * Q),
                            lambda p, ia, ib, im: (p, ib, im, ia))
    vmem_limit = 4 * block_bytes + (8 << 20)   # 2 double-buffered arrays + slack

    out4 = pl.pallas_call(
        _make_slab_swap_kernel(At, Bt, Q),
        out_shape=jax.ShapeDtypeStruct((P, B, M, A * Q), x.dtype),
        grid=grid,
        in_specs=[in_spec],
        out_specs=out_spec,
        compiler_params=pltpu.CompilerParams(
            dimension_semantics=("parallel",) * len(grid),
            vmem_limit_bytes=vmem_limit),
        cost_estimate=pl.CostEstimate(flops=0, transcendentals=0,
                                      bytes_accessed=2 * total_bytes),
    )(x4)
    return out4.reshape(out_shape)


def _transpose_last2(x, out_shape, P, A, B, itemsize, sub,
                     tgt_bytes, max_bytes, total_bytes):
    """Swap of the last two significant axes: dense (At, Bt) XLU transpose tiles."""
    # Tile sides must be legal as both lane and sublane extents (input AND output view):
    # full dim, or a multiple of 128 (which is also a multiple of the sublane pack).
    def legal(t, full):
        return t == full or (t % _LANE == 0 and t % sub == 0)

    a_cands = [d for d in _divisors(A) if legal(d, A)]
    b_cands = [d for d in _divisors(B) if legal(d, B)]
    tgt_elems = max(1, tgt_bytes // itemsize)

    best_fit = None   # largest block that fits the target budget
    min_pair = None   # smallest legal block overall
    for at in a_cands:
        for bt in b_cands:
            pr = at * bt
            if pr <= tgt_elems and (best_fit is None or pr > best_fit[0]):
                best_fit = (pr, at, bt)
            if min_pair is None or pr < min_pair[0]:
                min_pair = (pr, at, bt)

    if best_fit is not None:
        _, At, Bt = best_fit
    else:
        pr, At, Bt = min_pair
        if pr * itemsize > max_bytes:
            return None   # even the smallest legal block blows VMEM -> XLA fallback

    block_bytes = At * Bt * itemsize
    x3 = x.reshape(P, A, B)
    grid = (P, A // At, B // Bt)
    in_spec = pl.BlockSpec((None, At, Bt), lambda p, ia, ib: (p, ia, ib))
    out_spec = pl.BlockSpec((None, Bt, At), lambda p, ia, ib: (p, ib, ia))
    vmem_limit = 4 * block_bytes + (8 << 20)

    out3 = pl.pallas_call(
        _transpose2d_kernel,
        out_shape=jax.ShapeDtypeStruct((P, B, A), x.dtype),
        grid=grid,
        in_specs=[in_spec],
        out_specs=out_spec,
        compiler_params=pltpu.CompilerParams(
            dimension_semantics=("parallel",) * len(grid),
            vmem_limit_bytes=vmem_limit),
        cost_estimate=pl.CostEstimate(flops=0, transcendentals=0,
                                      bytes_accessed=2 * total_bytes),
    )(x3)
    return out3.reshape(out_shape)


# ----------------------------------------------------------------------------- public

def pallas_transpose(x, dim_a, dim_b, *, min_bytes_for_pallas=_DEFAULT_MIN_BYTES):
    """Swap axes dim_a and dim_b of x, matching torch.transpose semantics."""
    nd = x.ndim
    if nd == 0:
        return x
    a = dim_a % nd
    b = dim_b % nd
    if a == b:
        return x
    if a > b:
        a, b = b, a

    shape = tuple(int(s) for s in x.shape)
    out_shape = list(shape)
    out_shape[a], out_shape[b] = out_shape[b], out_shape[a]
    out_shape = tuple(out_shape)

    itemsize = int(jnp.dtype(x.dtype).itemsize)
    total_elems = int(np.prod(shape, dtype=np.int64))
    total_bytes = total_elems * itemsize

    P = int(np.prod(shape[:a], dtype=np.int64))
    A = shape[a]
    M = int(np.prod(shape[a + 1:b], dtype=np.int64))
    B = shape[b]
    Q = int(np.prod(shape[b + 1:], dtype=np.int64))

    # Degenerate cases where the swap is a pure relabelling of axes (no data movement).
    if total_elems == 0 or (A == 1 and B == 1) or ((A == 1 or B == 1) and M == 1):
        return x.reshape(out_shape)

    # Tiny tensors: kernel launch + pipeline warm-up dominates; let XLA copy them.
    if total_bytes < min_bytes_for_pallas:
        return jnp.swapaxes(x, a, b)

    sub = max(8, 32 // itemsize)          # dtype-aware sublane packing granularity
    tgt_bytes, max_bytes = _block_budget_bytes()

    result = None
    if Q % _LANE == 0:
        result = _transpose_lane_folded(x, out_shape, P, A, M, B, Q, itemsize, sub,
                                        tgt_bytes, max_bytes, total_bytes)
    elif Q == 1 and M == 1:
        result = _transpose_last2(x, out_shape, P, A, B, itemsize, sub,
                                  tgt_bytes, max_bytes, total_bytes)

    if result is not None:
        return result

    # TODO(synk): trailing extent that is not a lane multiple, or a non-adjacent swap
    # with the last axis, would require masked sub-vreg copies / sublane gathers inside
    # the kernel; XLA's transpose is faster for those layouts, so defer to it.
    return jnp.swapaxes(x, a, b)


class Transpose:
    """Pallas equivalent of the gin-configurable PyTorch Transpose module."""

    def __init__(self, dim_a, dim_b, min_bytes_for_pallas=_DEFAULT_MIN_BYTES):
        self.dim_a = dim_a
        self.dim_b = dim_b
        self.min_bytes_for_pallas = min_bytes_for_pallas

    def __call__(self, x):
        return pallas_transpose(x, self.dim_a, self.dim_b,
                                min_bytes_for_pallas=self.min_bytes_for_pallas)


if __name__ == "__main__":
    key = jax.random.PRNGKey(0)
    k1, k2, k3, k4 = jax.random.split(key, 4)

    # 1) General lane-folded path: non-adjacent swap, trailing extent Q = 128.
    x1 = jax.random.normal(k1, (2, 3, 8, 5, 128), dtype=jnp.float32)
    o1 = jax.block_until_ready(Transpose(1, 3, min_bytes_for_pallas=0)(x1))
    r1 = jnp.swapaxes(x1, 1, 3)
    assert o1.shape == r1.shape and o1.dtype == r1.dtype
    assert bool(jnp.array_equal(o1, r1))

    # 2) Last-two-axes swap: dense 2-D XLU transpose path.
    x2 = jax.random.normal(k2, (2, 16, 256), dtype=jnp.float32)
    o2 = jax.block_until_ready(Transpose(1, 2, min_bytes_for_pallas=0)(x2))
    r2 = jnp.swapaxes(x2, 1, 2)
    assert o2.shape == r2.shape and o2.dtype == r2.dtype
    assert bool(jnp.array_equal(o2, r2))

    # 3) bf16 on the lane-folded path (dtype-aware sublane tiling).
    x3 = jax.random.normal(k3, (2, 4, 16, 8, 128), dtype=jnp.float32).astype(jnp.bfloat16)
    o3 = jax.block_until_ready(Transpose(1, 3, min_bytes_for_pallas=0)(x3))
    r3 = jnp.swapaxes(x3, 1, 3)
    assert o3.shape == r3.shape and o3.dtype == r3.dtype
    assert bool(jnp.array_equal(o3, r3))

    # 4) Awkward layout (trailing dim 16, not a lane multiple): XLA fallback path.
    x4 = jax.random.normal(k4, (2, 4, 16, 16), dtype=jnp.float32)
    o4 = jax.block_until_ready(Transpose(1, 2)(x4))
    r4 = jnp.swapaxes(x4, 1, 2)
    assert o4.shape == r4.shape and o4.dtype == r4.dtype
    assert bool(jnp.array_equal(o4, r4))

    print("KERNEL_OK")
</pallas_src>

<mosaic_0001>
module attributes {stable_mosaic.version = 11 : i64} {
  func.func @kernel(%arg0: i32, %arg1: i32, %arg2: i32, %arg3: i32, %arg4: memref<1x3x8x640xf32, #tpu.memory_space<vmem>>, %arg5: memref<1x5x8x384xf32, #tpu.memory_space<vmem>>) attributes {dimension_semantics = [#tpu.dimension_semantics<parallel>, #tpu.dimension_semantics<parallel>, #tpu.dimension_semantics<parallel>, #tpu.dimension_semantics<parallel>], iteration_bounds = array<i64: 2, 1, 1, 1>, scalar_prefetch = 0 : i64, scratch_operands = 0 : i64, tpu.core_type = #tpu.core_type<tc>, window_params = [{transform_indices = @transform_0, window_bounds = array<i64: 1, 3, 8, 640>}, {transform_indices = @transform_1, window_bounds = array<i64: 1, 5, 8, 384>}]} {
    %c0 = arith.constant 0 : index
    %c0_0 = arith.constant 0 : index
    %c0_1 = arith.constant 0 : index
    %c0_2 = arith.constant 0 : index
    %0 = vector.load %arg4[%c0, %c0_0, %c0_1, %c0_2] : memref<1x3x8x640xf32, #tpu.memory_space<vmem>>, vector<1x1x8x128xf32>
    %1 = vector.shape_cast %0 : vector<1x1x8x128xf32> to vector<8x128xf32>
    %c0_3 = arith.constant 0 : index
    %c0_4 = arith.constant 0 : index
    %c0_5 = arith.constant 0 : index
    %c0_6 = arith.constant 0 : index
    %2 = vector.load %arg5[%c0_3, %c0_4, %c0_5, %c0_6] : memref<1x5x8x384xf32, #tpu.memory_space<vmem>>, vector<1x1x8x128xf32>
    %3 = vector.shape_cast %2 : vector<1x1x8x128xf32> to vector<8x128xf32>
    %4 = vector.shape_cast %1 : vector<8x128xf32> to vector<1x1x8x128xf32>
    tpu.vector_store %arg5[%c0_3, %c0_4, %c0_5, %c0_6], %4 {strides = array<i32>} : memref<1x5x8x384xf32, #tpu.memory_space<vmem>>, vector<1x1x8x128xf32>,
    %c0_7 = arith.constant 0 : index
    %c0_8 = arith.constant 0 : index
    %c0_9 = arith.constant 0 : index
    %c128 = arith.constant 128 : index
    %5 = vector.load %arg4[%c0_7, %c0_8, %c0_9, %c128] : memref<1x3x8x640xf32, #tpu.memory_space<vmem>>, vector<1x1x8x128xf32>
    %6 = vector.shape_cast %5 : vector<1x1x8x128xf32> to vector<8x128xf32>
    %c0_10 = arith.constant 0 : index
    %c1 = arith.constant 1 : index
    %c0_11 = arith.constant 0 : index
    %c0_12 = arith.constant 0 : index
    %7 = vector.load %arg5[%c0_10, %c1, %c0_11, %c0_12] : memref<1x5x8x384xf32, #tpu.memory_space<vmem>>, vector<1x1x8x128xf32>
    %8 = vector.shape_cast %7 : vector<1x1x8x128xf32> to vector<8x128xf32>
    %9 = vector.shape_cast %6 : vector<8x128xf32> to vector<1x1x8x128xf32>
    tpu.vector_store %arg5[%c0_10, %c1, %c0_11, %c0_12], %9 {strides = array<i32>} : memref<1x5x8x384xf32, #tpu.memory_space<vmem>>, vector<1x1x8x128xf32>,
    %c0_13 = arith.constant 0 : index
    %c0_14 = arith.constant 0 : index
    %c0_15 = arith.constant 0 : index
    %c256 = arith.constant 256 : index
    %10 = vector.load %arg4[%c0_13, %c0_14, %c0_15, %c256] : memref<1x3x8x640xf32, #tpu.memory_space<vmem>>, vector<1x1x8x128xf32>
    %11 = vector.shape_cast %10 : vector<1x1x8x128xf32> to vector<8x128xf32>
    %c0_16 = arith.constant 0 : index
    %c2 = arith.constant 2 : index
    %c0_17 = arith.constant 0 : index
    %c0_18 = arith.constant 0 : index
    %12 = vector.load %arg5[%c0_16, %c2, %c0_17, %c0_18] : memref<1x5x8x384xf32, #tpu.memory_space<vmem>>, vector<1x1x8x128xf32>
    %13 = vector.shape_cast %12 : vector<1x1x8x128xf32> to vector<8x128xf32>
    %14 = vector.shape_cast %11 : vector<8x128xf32> to vector<1x1x8x128xf32>
    tpu.vector_store %arg5[%c0_16, %c2, %c0_17, %c0_18], %14 {strides = array<i32>} : memref<1x5x8x384xf32, #tpu.memory_space<vmem>>, vector<1x1x8x128xf32>,
    %c0_19 = arith.constant 0 : index
    %c0_20 = arith.constant 0 : index
    %c0_21 = arith.constant 0 : index
    %c384 = arith.constant 384 : index
    %15 = vector.load %arg4[%c0_19, %c0_20, %c0_21, %c384] : memref<1x3x8x640xf32, #tpu.memory_space<vmem>>, vector<1x1x8x128xf32>
    %16 = vector.shape_cast %15 : vector<1x1x8x128xf32> to vector<8x128xf32>
    %c0_22 = arith.constant 0 : index
    %c3 = arith.constant 3 : index
    %c0_23 = arith.constant 0 : index
    %c0_24 = arith.constant 0 : index
    %17 = vector.load %arg5[%c0_22, %c3, %c0_23, %c0_24] : memref<1x5x8x384xf32, #tpu.memory_space<vmem>>, vector<1x1x8x128xf32>
    %18 = vector.shape_cast %17 : vector<1x1x8x128xf32> to vector<8x128xf32>
    %19 = vector.shape_cast %16 : vector<8x128xf32> to vector<1x1x8x128xf32>
    tpu.vector_store %arg5[%c0_22, %c3, %c0_23, %c0_24], %19 {strides = array<i32>} : memref<1x5x8x384xf32, #tpu.memory_space<vmem>>, vector<1x1x8x128xf32>,
    %c0_25 = arith.constant 0 : index
    %c0_26 = arith.constant 0 : index
    %c0_27 = arith.constant 0 : index
    %c512 = arith.constant 512 : index
    %20 = vector.load %arg4[%c0_25, %c0_26, %c0_27, %c512] : memref<1x3x8x640xf32, #tpu.memory_space<vmem>>, vector<1x1x8x128xf32>
    %21 = vector.shape_cast %20 : vector<1x1x8x128xf32> to vector<8x128xf32>
    %c0_28 = arith.constant 0 : index
    %c4 = arith.constant 4 : index
    %c0_29 = arith.constant 0 : index
    %c0_30 = arith.constant 0 : index
    %22 = vector.load %arg5[%c0_28, %c4, %c0_29, %c0_30] : memref<1x5x8x384xf32, #tpu.memory_space<vmem>>, vector<1x1x8x128xf32>
    %23 = vector.shape_cast %22 : vector<1x1x8x128xf32> to vector<8x128xf32>
    %24 = vector.shape_cast %21 : vector<8x128xf32> to vector<1x1x8x128xf32>
    tpu.vector_store %arg5[%c0_28, %c4, %c0_29, %c0_30], %24 {strides = array<i32>} : memref<1x5x8x384xf32, #tpu.memory_space<vmem>>, vector<1x1x8x128xf32>,
    %c0_31 = arith.constant 0 : index
    %c1_32 = arith.constant 1 : index
    %c0_33 = arith.constant 0 : index
    %c0_34 = arith.constant 0 : index
    %25 = vector.load %arg4[%c0_31, %c1_32, %c0_33, %c0_34] : memref<1x3x8x640xf32, #tpu.memory_space<vmem>>, vector<1x1x8x128xf32>
    %26 = vector.shape_cast %25 : vector<1x1x8x128xf32> to vector<8x128xf32>
    %c0_35 = arith.constant 0 : index
    %c0_36 = arith.constant 0 : index
    %c0_37 = arith.constant 0 : index
    %c128_38 = arith.constant 128 : index
    %27 = vector.load %arg5[%c0_35, %c0_36, %c0_37, %c128_38] : memref<1x5x8x384xf32, #tpu.memory_space<vmem>>, vector<1x1x8x128xf32>
    %28 = vector.shape_cast %27 : vector<1x1x8x128xf32> to vector<8x128xf32>
    %29 = vector.shape_cast %26 : vector<8x128xf32> to vector<1x1x8x128xf32>
    tpu.vector_store %arg5[%c0_35, %c0_36, %c0_37, %c128_38], %29 {strides = array<i32>} : memref<1x5x8x384xf32, #tpu.memory_space<vmem>>, vector<1x1x8x128xf32>,
    %c0_39 = arith.constant 0 : index
    %c1_40 = arith.constant 1 : index
    %c0_41 = arith.constant 0 : index
    %c128_42 = arith.constant 128 : index
    %30 = vector.load %arg4[%c0_39, %c1_40, %c0_41, %c128_42] : memref<1x3x8x640xf32, #tpu.memory_space<vmem>>, vector<1x1x8x128xf32>
    %31 = vector.shape_cast %30 : vector<1x1x8x128xf32> to vector<8x128xf32>
    %c0_43 = arith.constant 0 : index
    %c1_44 = arith.constant 1 : index
    %c0_45 = arith.constant 0 : index
    %c128_46 = arith.constant 128 : index
    %32 = vector.load %arg5[%c0_43, %c1_44, %c0_45, %c128_46] : memref<1x5x8x384xf32, #tpu.memory_space<vmem>>, vector<1x1x8x128xf32>
    %33 = vector.shape_cast %32 : vector<1x1x8x128xf32> to vector<8x128xf32>
    %34 = vector.shape_cast %31 : vector<8x128xf32> to vector<1x1x8x128xf32>
    tpu.vector_store %arg5[%c0_43, %c1_44, %c0_45, %c128_46], %34 {strides = array<i32>} : memref<1x5x8x384xf32, #tpu.memory_space<vmem>>, vector<1x1x8x128xf32>,
    %c0_47 = arith.constant 0 : index
    %c1_48 = arith.constant 1 : index
    %c0_49 = arith.constant 0 : index
    %c256_50 = arith.constant 256 : index
    %35 = vector.load %arg4[%c0_47, %c1_48, %c0_49, %c256_50] : memref<1x3x8x640xf32, #tpu.memory_space<vmem>>, vector<1x1x8x128xf32>
    %36 = vector.shape_cast %35 : vector<1x1x8x128xf32> to vector<8x128xf32>
    %c0_51 = arith.constant 0 : index
    %c2_52 = arith.constant 2 : index
    %c0_53 = arith.constant 0 : index
    %c128_54 = arith.constant 128 : index
    %37 = vector.load %arg5[%c0_51, %c2_52, %c0_53, %c128_54] : memref<1x5x8x384xf32, #tpu.memory_space<vmem>>, vector<1x1x8x128xf32>
    %38 = vector.shape_cast %37 : vector<1x1x8x128xf32> to vector<8x128xf32>
    %39 = vector.shape_cast %36 : vector<8x128xf32> to vector<1x1x8x128xf32>
    tpu.vector_store %arg5[%c0_51, %c2_52, %c0_53, %c128_54], %39 {strides = array<i32>} : memref<1x5x8x384xf32, #tpu.memory_space<vmem>>, vector<1x1x8x128xf32>,
    %c0_55 = arith.constant 0 : index
    %c1_56 = arith.constant 1 : index
    %c0_57 = arith.constant 0 : index
    %c384_58 = arith.constant 384 : index
    %40 = vector.load %arg4[%c0_55, %c1_56, %c0_57, %c384_58] : memref<1x3x8x640xf32, #tpu.memory_space<vmem>>, vector<1x1x8x128xf32>
    %41 = vector.shape_cast %40 : vector<1x1x8x128xf32> to vector<8x128xf32>
    %c0_59 = arith.constant 0 : index
    %c3_60 = arith.constant 3 : index
    %c0_61 = arith.constant 0 : index
    %c128_62 = arith.constant 128 : index
    %42 = vector.load %arg5[%c0_59, %c3_60, %c0_61, %c128_62] : memref<1x5x8x384xf32, #tpu.memory_space<vmem>>, vector<1x1x8x128xf32>
    %43 = vector.shape_cast %42 : vector<1x1x8x128xf32> to vector<8x128xf32>
    %44 = vector.shape_cast %41 : vector<8x128xf32> to vector<1x1x8x128xf32>
    tpu.vector_store %arg5[%c0_59, %c3_60, %c0_61, %c128_62], %44 {strides = array<i32>} : memref<1x5x8x384xf32, #tpu.memory_space<vmem>>, vector<1x1x8x128xf32>,
    %c0_63 = arith.constant 0 : index
    %c1_64 = arith.constant 1 : index
    %c0_65 = arith.constant 0 : index
    %c512_66 = arith.constant 512 : index
    %45 = vector.load %arg4[%c0_63, %c1_64, %c0_65, %c512_66] : memref<1x3x8x640xf32, #tpu.memory_space<vmem>>, vector<1x1x8x128xf32>
    %46 = vector.shape_cast %45 : vector<1x1x8x128xf32> to vector<8x128xf32>
    %c0_67 = arith.constant 0 : index
    %c4_68 = arith.constant 4 : index
    %c0_69 = arith.constant 0 : index
    %c128_70 = arith.constant 128 : index
    %47 = vector.load %arg5[%c0_67, %c4_68, %c0_69, %c128_70] : memref<1x5x8x384xf32, #tpu.memory_space<vmem>>, vector<1x1x8x128xf32>
    %48 = vector.shape_cast %47 : vector<1x1x8x128xf32> to vector<8x128xf32>
    %49 = vector.shape_cast %46 : vector<8x128xf32> to vector<1x1x8x128xf32>
    tpu.vector_store %arg5[%c0_67, %c4_68, %c0_69, %c128_70], %49 {strides = array<i32>} : memref<1x5x8x384xf32, #tpu.memory_space<vmem>>, vector<1x1x8x128xf32>,
    %c0_71 = arith.constant 0 : index
    %c2_72 = arith.constant 2 : index
    %c0_73 = arith.constant 0 : index
    %c0_74 = arith.constant 0 : index
    %50 = vector.load %arg4[%c0_71, %c2_72, %c0_73, %c0_74] : memref<1x3x8x640xf32, #tpu.memory_space<vmem>>, vector<1x1x8x128xf32>
    %51 = vector.shape_cast %50 : vector<1x1x8x128xf32> to vector<8x128xf32>
    %c0_75 = arith.constant 0 : index
    %c0_76 = arith.constant 0 : index
    %c0_77 = arith.constant 0 : index
    %c256_78 = arith.constant 256 : index
    %52 = vector.load %arg5[%c0_75, %c0_76, %c0_77, %c256_78] : memref<1x5x8x384xf32, #tpu.memory_space<vmem>>, vector<1x1x8x128xf32>
    %53 = vector.shape_cast %52 : vector<1x1x8x128xf32> to vector<8x128xf32>
    %54 = vector.shape_cast %51 : vector<8x128xf32> to vector<1x1x8x128xf32>
    tpu.vector_store %arg5[%c0_75, %c0_76, %c0_77, %c256_78], %54 {strides = array<i32>} : memref<1x5x8x384xf32, #tpu.memory_space<vmem>>, vector<1x1x8x128xf32>,
    %c0_79 = arith.constant 0 : index
    %c2_80 = arith.constant 2 : index
    %c0_81 = arith.constant 0 : index
    %c128_82 = arith.constant 128 : index
    %55 = vector.load %arg4[%c0_79, %c2_80, %c0_81, %c128_82] : memref<1x3x8x640xf32, #tpu.memory_space<vmem>>, vector<1x1x8x128xf32>
    %56 = vector.shape_cast %55 : vector<1x1x8x128xf32> to vector<8x128xf32>
    %c0_83 = arith.constant 0 : index
    %c1_84 = arith.constant 1 : index
    %c0_85 = arith.constant 0 : index
    %c256_86 = arith.constant 256 : index
    %57 = vector.load %arg5[%c0_83, %c1_84, %c0_85, %c256_86] : memref<1x5x8x384xf32, #tpu.memory_space<vmem>>, vector<1x1x8x128xf32>
    %58 = vector.shape_cast %57 : vector<1x1x8x128xf32> to vector<8x128xf32>
    %59 = vector.shape_cast %56 : vector<8x128xf32> to vector<1x1x8x128xf32>
    tpu.vector_store %arg5[%c0_83, %c1_84, %c0_85, %c256_86], %59 {strides = array<i32>} : memref<1x5x8x384xf32, #tpu.memory_space<vmem>>, vector<1x1x8x128xf32>,
    %c0_87 = arith.constant 0 : index
    %c2_88 = arith.constant 2 : index
    %c0_89 = arith.constant 0 : index
    %c256_90 = arith.constant 256 : index
    %60 = vector.load %arg4[%c0_87, %c2_88, %c0_89, %c256_90] : memref<1x3x8x640xf32, #tpu.memory_space<vmem>>, vector<1x1x8x128xf32>
    %61 = vector.shape_cast %60 : vector<1x1x8x128xf32> to vector<8x128xf32>
    %c0_91 = arith.constant 0 : index
    %c2_92 = arith.constant 2 : index
    %c0_93 = arith.constant 0 : index
    %c256_94 = arith.constant 256 : index
    %62 = vector.load %arg5[%c0_91, %c2_92, %c0_93, %c256_94] : memref<1x5x8x384xf32, #tpu.memory_space<vmem>>, vector<1x1x8x128xf32>
    %63 = vector.shape_cast %62 : vector<1x1x8x128xf32> to vector<8x128xf32>
    %64 = vector.shape_cast %61 : vector<8x128xf32> to vector<1x1x8x128xf32>
    tpu.vector_store %arg5[%c0_91, %c2_92, %c0_93, %c256_94], %64 {strides = array<i32>} : memref<1x5x8x384xf32, #tpu.memory_space<vmem>>, vector<1x1x8x128xf32>,
    %c0_95 = arith.constant 0 : index
    %c2_96 = arith.constant 2 : index
    %c0_97 = arith.constant 0 : index
    %c384_98 = arith.constant 384 : index
    %65 = vector.load %arg4[%c0_95, %c2_96, %c0_97, %c384_98] : memref<1x3x8x640xf32, #tpu.memory_space<vmem>>, vector<1x1x8x128xf32>
    %66 = vector.shape_cast %65 : vector<1x1x8x128xf32> to vector<8x128xf32>
    %c0_99 = arith.constant 0 : index
    %c3_100 = arith.constant 3 : index
    %c0_101 = arith.constant 0 : index
    %c256_102 = arith.constant 256 : index
    %67 = vector.load %arg5[%c0_99, %c3_100, %c0_101, %c256_102] : memref<1x5x8x384xf32, #tpu.memory_space<vmem>>, vector<1x1x8x128xf32>
    %68 = vector.shape_cast %67 : vector<1x1x8x128xf32> to vector<8x128xf32>
    %69 = vector.shape_cast %66 : vector<8x128xf32> to vector<1x1x8x128xf32>
    tpu.vector_store %arg5[%c0_99, %c3_100, %c0_101, %c256_102], %69 {strides = array<i32>} : memref<1x5x8x384xf32, #tpu.memory_space<vmem>>, vector<1x1x8x128xf32>,
    %c0_103 = arith.constant 0 : index
    %c2_104 = arith.constant 2 : index
    %c0_105 = arith.constant 0 : index
    %c512_106 = arith.constant 512 : index
    %70 = vector.load %arg4[%c0_103, %c2_104, %c0_105, %c512_106] : memref<1x3x8x640xf32, #tpu.memory_space<vmem>>, vector<1x1x8x128xf32>
    %71 = vector.shape_cast %70 : vector<1x1x8x128xf32> to vector<8x128xf32>
    %c0_107 = arith.constant 0 : index
    %c4_108 = arith.constant 4 : index
    %c0_109 = arith.constant 0 : index
    %c256_110 = arith.constant 256 : index
    %72 = vector.load %arg5[%c0_107, %c4_108, %c0_109, %c256_110] : memref<1x5x8x384xf32, #tpu.memory_space<vmem>>, vector<1x1x8x128xf32>
    %73 = vector.shape_cast %72 : vector<1x1x8x128xf32> to vector<8x128xf32>
    %74 = vector.shape_cast %71 : vector<8x128xf32> to vector<1x1x8x128xf32>
    tpu.vector_store %arg5[%c0_107, %c4_108, %c0_109, %c256_110], %74 {strides = array<i32>} : memref<1x5x8x384xf32, #tpu.memory_space<vmem>>, vector<1x1x8x128xf32>,
    return
  }
  func.func @transform_0(%arg0: i32, %arg1: i32, %arg2: i32, %arg3: i32) -> (i32, i32, i32, i32) {
    %c0_i32 = arith.constant 0 : i32
    return %arg0, %arg1, %arg3, %arg2 : i32, i32, i32, i32
  }
  func.func @transform_1(%arg0: i32, %arg1: i32, %arg2: i32, %arg3: i32) -> (i32, i32, i32, i32) {
    %c0_i32 = arith.constant 0 : i32
    return %arg0, %arg2, %arg3, %arg1 : i32, i32, i32, i32
  }
}

</mosaic_0001>

<llo_original>
// kernel: tpu_custom_call.1
$region0: #{tpu_custom_call.1}
  #allocation0 [shape = 'u32[]', space=smem, size = 0x4, offset = 0x4, fixed_abs, tag = 'smem constant byte address 0x4 - core index']
  #allocation1 [shape = 'u32[144,128]{1,0:T(1,128)}', space=vmem, size = 0x12000, scoped, tag = 'internal scratch']
  %s0 = inlined_call_operand.hbm [shape: f32[2,3,8,640], index: 0, kind: input, shape index: {}]
  %s1 = inlined_call_operand.hbm [shape: f32[2,5,8,384], index: 1, kind: output, shape index: {}]
  %s2 = sld [smem:[#allocation0]]
  $region41: #{tpu_custom_call.1} parent=0
    _
  %s4 = ssub.s32 1, %s2
  %s5 = scalar_select 0, %s4, %s2
  $region1: #{tpu_custom_call.1} parent=0
    #allocation2 [shape = 'u8[122880]{0}', space=vmem, size = 0x1e000, scoped, tag = 'input window, operand 0']
    #allocation3 [shape = 's32[2]{0}', space=sflag, size = 0x8, scoped, tag = 'scoped memory for tpu_custom_call.1']
    #allocation4 [shape = 's32[2]{0}', space=sflag, size = 0x8, scoped, tag = 'scoped memory for tpu_custom_call.1']
    #allocation5 [shape = 'u8[122880]{0}', space=vmem, size = 0x1e000, scoped, tag = 'output window, operand 0']
    %6 = vsyncpa [#allocation3], 0
    %s7 = scalar_lea.sflag [#allocation3], 1
    %8 = vsyncpa %s7, 0
    %9 = vsyncpa [#allocation4], 0
    %s10 = scalar_lea.sflag [#allocation4], 1
    %11 = vsyncpa %s10, 0
    loop: start=0, step=1, limit=4
    $region2: #{tpu_custom_call.1} parent=1 // loop_pre_header
      _
    $region3: #{tpu_custom_call.1} parent=1 // loop_header
      %s13 = sphi 0, %s17
      %p14 = scmp.ge.s32.totalorder %s13, 4
      %s20 = sphi 0, %s46
      %s21 = sphi 0, %s42
      %s22 = sphi 0, %s38
      %s23 = sphi 0, %s34
      %s24 = sphi 0, %s20
      %s25 = sphi 0, %s21
      %s26 = sphi 0, %s22
      %s27 = sphi 0, %s23
      %s28 = sphi 0, %s24
      %s29 = sphi 0, %s25
      %s30 = sphi 0, %s26
      %s31 = sphi 0, %s27
      %s55 = sphi 0, %s57
      %s58 = sphi 0, %s55
      %s59 = sphi 0, %s58
      %s75 = sphi 0, %s59
      %s87 = sphi 0, %s89
      %s90 = sphi 0, %s87
      %s91 = sphi 0, %s90
      %s107 = sphi 0, %s91
    $region4: #{tpu_custom_call.1} parent=1 // loop_header_branch
      %16 = sbr.rel (%p14) target = $region8
    $region5: #{tpu_custom_call.1} parent=1 // loop_body
      %s18 = ssub.s32 %s13, 1
      %s19 = ssub.s32 %s13, 2
      %s32 = sadd.s32 1, %s23
      %p33 = scmp.ge.s32.totalorder %s32, 1
      %s34 = scalar_select %p33, 0, %s32
      %s35 = sadd.s32 1, %s22
      %s36 = scalar_select %p33, %s35, %s22
      %p37 = scmp.ge.s32.totalorder %s36, 1
      %s38 = scalar_select %p37, 0, %s36
      %s39 = sadd.s32 1, %s21
      %s40 = scalar_select %p37, %s39, %s21
      %p41 = scmp.ge.s32.totalorder %s40, 1
      %s42 = scalar_select %p41, 0, %s40
      %s43 = sadd.s32 1, %s20
      %s44 = scalar_select %p41, %s43, %s20
      %p45 = scmp.ge.s32.totalorder %s44, 2
      %s46 = scalar_select %p45, 0, %s44
      %s47 = ssub.s32 %s20, %s46
      %s48 = ssub.s32 %s21, %s42
      %s49 = sor.u32 %s47, %s48
      %s50 = ssub.s32 %s23, %s34
      %s51 = sor.u32 %s49, %s50
      %s52 = ssub.s32 %s22, %s38
      %s53 = sor.u32 %s51, %s52
      %p54 = scmp.eq.s32.totalorder %s53, 0
      %s56 = sadd.s32 %s55, 1
      %s57 = scalar_select %p54, %s55, %s56
      %p60 = pneg %p54
      %p61 = scmp.eq.s32.totalorder %s13, 1
      %p62 = por %p60, %p61
      %p63 = scmp.ne.s32.totalorder %s55, %s58
      %p64 = scmp.eq.s32.totalorder %s13, 0
      %p65 = por %p63, %p64
      %p66 = scmp.ne.s32.totalorder %s55, %s58
      %p67 = scmp.eq.s32.totalorder %s18, 1
      %p68 = por %p66, %p67
      %p69 = scmp.ne.s32.totalorder %s58, %s59
      %p70 = scmp.eq.s32.totalorder %s18, 0
      %p71 = por %p69, %p70
      %p72 = scmp.ne.s32.totalorder %s58, %s59
      %p73 = scmp.eq.s32.totalorder %s19, 1
      %p74 = por %p72, %p73
      %p76 = scmp.ne.s32.totalorder %s59, %s75
      %p77 = scmp.eq.s32.totalorder %s19, 0
      %p78 = por %p76, %p77
      %s79 = ssub.s32 %s20, %s46
      %s80 = ssub.s32 %s22, %s38
      %s81 = sor.u32 %s79, %s80
      %s82 = ssub.s32 %s23, %s34
      %s83 = sor.u32 %s81, %s82
      %s84 = ssub.s32 %s21, %s42
      %s85 = sor.u32 %s83, %s84
      %p86 = scmp.eq.s32.totalorder %s85, 0
      %s88 = sadd.s32 %s87, 1
      %s89 = scalar_select %p86, %s87, %s88
      %p92 = pneg %p86
      %p93 = scmp.eq.s32.totalorder %s13, 1
      %p94 = por %p92, %p93
      %p95 = scmp.ne.s32.totalorder %s87, %s90
      %p96 = scmp.eq.s32.totalorder %s13, 0
      %p97 = por %p95, %p96
      %p98 = scmp.ne.s32.totalorder %s87, %s90
      %p99 = scmp.eq.s32.totalorder %s18, 1
      %p100 = por %p98, %p99
      %p101 = scmp.ne.s32.totalorder %s90, %s91
      %p102 = scmp.eq.s32.totalorder %s18, 0
      %p103 = por %p101, %p102
      %p104 = scmp.ne.s32.totalorder %s90, %s91
      %p105 = scmp.eq.s32.totalorder %s19, 1
      %p106 = por %p104, %p105
      %p108 = scmp.ne.s32.totalorder %s91, %s107
      %p109 = scmp.eq.s32.totalorder %s19, 0
      %p110 = por %p108, %p109
      %p111 = scmp.le.s32.totalorder 1, %s13
      %p112 = scmp.lt.s32.totalorder %s13, 3
      %p113 = pnand %p111, %p112
      %p114 = pneg %p113
      // Predicated region
      $region9: #{tpu_custom_call.1} parent=5 // pred_check
        _
      $region10: #{tpu_custom_call.1} parent=5 // pred_check_branch
        %116 = sbr.rel (%p113) target = $region12
      $region11: #{tpu_custom_call.1} parent=5 // pred_region
        %s117 = ssub.s32 %s13, 1
      $region12: #{tpu_custom_call.1} parent=5 // pred_fallthru
        _
      %p118 = scmp.lt.s32.totalorder %s13, 2
      // Predicated region
      $region13: #{tpu_custom_call.1} parent=5 // pred_check
        %p119 = pneg %p118
      $region14: #{tpu_custom_call.1} parent=5 // pred_check_branch
        %121 = sbr.rel (%p119) target = $region16
      $region15: #{tpu_custom_call.1} parent=5 // pred_region
        // Predicated region
        $region17: #{tpu_custom_call.1} parent=15 // pred_check
          %p122 = pneg %p65
        $region18: #{tpu_custom_call.1} parent=15 // pred_check_branch
          %124 = sbr.rel (%p122) target = $region20
        $region19: #{tpu_custom_call.1} parent=15 // pred_region
          %s125 = sand.u32 %s55, 1
          %s126 = scalar_lea.sflag [#allocation3], %s125
          %s127 = sand.u32 %s55, 1
          %s128 = smul.addr %s127, 120
          %s129 = scalar_lea.vmem [#allocation2], %s128
          %s130 = smul.u32 3, %s21
          %s131 = smul.u32 5, %s22
          %s133 = ssub.s32 1920, 1920
          %134 = vsyncadd %s126, %s133
          %s135 = smul.addr %s23, 5
          %s136 = sadd.s32 %s131, %s135
          %s137 = smul.addr %s130, 5
          %s138 = sadd.s32 %s136, %s137
          %s139 = smul.addr %s20, 15
          %s140 = sadd.s32 %s138, %s139
          %s141 = smul.addr %s140, 128
          %s142 = scalar_lea.hbm %s0, %s141
          %s143 = sshll.u32 %s129, 4
          %s144 = int_to_ptr.vmem [resolvable:$true] %s143
          %149 = dma.hbm_to_vmem [thread:$0]  %s142, 1920, %s144, %s126, 640, 640, 40
        $region20: #{tpu_custom_call.1} parent=15 // pred_fallthru
          _
      $region16: #{tpu_custom_call.1} parent=5 // pred_fallthru
        _
      %p150 = scmp.le.s32.totalorder 1, %s13
      %p151 = scmp.lt.s32.totalorder %s13, 3
      %p152 = pnand %p150, %p151
      %p153 = pneg %p152
      // Predicated region
      $region21: #{tpu_custom_call.1} parent=5 // pred_check
        _
      $region22: #{tpu_custom_call.1} parent=5 // pred_check_branch
        %155 = sbr.rel (%p152) target = $region24
      $region23: #{tpu_custom_call.1} parent=5 // pred_region
        %s156 = ssub.s32 %s13, 1
        %s157 = sand.u32 %s58, 1
        %s158 = scalar_lea.sflag [#allocation3], %s157
        %s159 = sand.u32 %s58, 1
        %s160 = smul.addr %s159, 120
        %s161 = scalar_lea.vmem [#allocation2], %s160
        // Predicated region
        $region25: #{tpu_custom_call.1} parent=23 // pred_check
          %p162 = pneg %p71
        $region26: #{tpu_custom_call.1} parent=23 // pred_check_branch
          %164 = sbr.rel (%p162) target = $region28
        $region27: #{tpu_custom_call.1} parent=23 // pred_region
          %165 = dma.done %s158, 1920
        $region28: #{tpu_custom_call.1} parent=23 // pred_fallthru
          _
        %s166 = sand.u32 %s58, 1
        %s167 = scalar_lea.sflag [#allocation3], %s166
        %s168 = sand.u32 %s58, 1
        %s169 = smul.addr %s168, 120
        %s170 = scalar_lea.vmem [#allocation2], %s169
        %p171 = pneg %p71
        %p172 = pneg %p68
        %p173 = pneg %p103
        %p174 = pneg %p100
        %s175 = sand.u32 %s90, 1
        %s176 = scalar_lea.sflag [#allocation4], %s175
        %s177 = sand.u32 %s90, 1
        %s178 = smul.addr %s177, 120
        %s179 = scalar_lea.vmem [#allocation5], %s178
        %s180 = smul.u32 3, %s25
        %s181 = smul.u32 5, %s26
        %s182 = smul.u32 5, %s26
        %s183 = smul.u32 3, %s25
        %v184 = vld [vmem:[%s161] sm:$0xff]
        %185 = vst [vmem:[%s179] sm:$0xff] %v184
        %v186 = vld [vmem:[%s161 + $0x8] sm:$0xff]
        %s187 = scalar_lea.vmem %s179, 24 [#allocation5]
        %188 = vst [vmem:[%s187] sm:$0xff] %v186
        %v189 = vld [vmem:[%s161 + $0x10] sm:$0xff]
        %s190 = scalar_lea.vmem %s179, 48 [#allocation5]
        %191 = vst [vmem:[%s190] sm:$0xff] %v189
        %v192 = vld [vmem:[%s161 + $0x18] sm:$0xff]
        %s193 = scalar_lea.vmem %s179, 72 [#allocation5]
        %194 = vst [vmem:[%s193] sm:$0xff] %v192
        %v195 = vld [vmem:[%s161 + $0x20] sm:$0xff]
        %s196 = scalar_lea.vmem %s179, 96 [#allocation5]
        %197 = vst [vmem:[%s196] sm:$0xff] %v195
        %s198 = scalar_lea.vmem %s161, 40 [#allocation2]
        %v199 = vld [vmem:[%s198] sm:$0xff]
        %200 = vst [vmem:[%s179 + $0x8] sm:$0xff] %v199
        %v201 = vld [vmem:[%s198 + $0x8] sm:$0xff]
        %202 = vst [vmem:[%s187 + $0x8] sm:$0xff] %v201
        %v203 = vld [vmem:[%s198 + $0x10] sm:$0xff]
        %204 = vst [vmem:[%s190 + $0x8] sm:$0xff] %v203
        %v205 = vld [vmem:[%s198 + $0x18] sm:$0xff]
        %206 = vst [vmem:[%s193 + $0x8] sm:$0xff] %v205
        %v207 = vld [vmem:[%s198 + $0x20] sm:$0xff]
        %208 = vst [vmem:[%s196 + $0x8] sm:$0xff] %v207
        %s209 = scalar_lea.vmem %s161, 80 [#allocation2]
        %v210 = vld [vmem:[%s209] sm:$0xff]
        %211 = vst [vmem:[%s179 + $0x10] sm:$0xff] %v210
        %v212 = vld [vmem:[%s209 + $0x8] sm:$0xff]
        %213 = vst [vmem:[%s187 + $0x10] sm:$0xff] %v212
        %v214 = vld [vmem:[%s209 + $0x10] sm:$0xff]
        %215 = vst [vmem:[%s190 + $0x10] sm:$0xff] %v214
        %v216 = vld [vmem:[%s209 + $0x18] sm:$0xff]
        %217 = vst [vmem:[%s193 + $0x10] sm:$0xff] %v216
        %v218 = vld [vmem:[%s209 + $0x20] sm:$0xff]
        %219 = vst [vmem:[%s196 + $0x10] sm:$0xff] %v218
        %s220 = sand.u32 %s90, 1
        %s221 = scalar_lea.sflag [#allocation4], %s220
        %s222 = sand.u32 %s90, 1
        %s223 = smul.addr %s222, 120
        %s224 = scalar_lea.vmem [#allocation5], %s223
        // Predicated region
        $region29: #{tpu_custom_call.1} parent=23 // pred_check
          %p225 = pneg %p100
        $region30: #{tpu_custom_call.1} parent=23 // pred_check_branch
          %227 = sbr.rel (%p225) target = $region32
        $region31: #{tpu_custom_call.1} parent=23 // pred_region
          %s228 = smul.u32 5, %s26
          %s229 = smul.u32 3, %s25
          %s231 = ssub.s32 1920, 1920
          %232 = vsyncadd %s221, %s231
          %s233 = smul.addr %s27, 3
          %s234 = sadd.s32 %s229, %s233
          %s235 = smul.addr %s228, 3
          %s236 = sadd.s32 %s234, %s235
          %s237 = smul.addr %s24, 15
          %s238 = sadd.s32 %s236, %s237
          %s239 = smul.addr %s238, 128
          %s240 = scalar_lea.hbm %s1, %s239
          %s241 = sshll.u32 %s224, 4
          %s242 = int_to_ptr.vmem [resolvable:$true] %s241
          %247 = dma.vmem_to_hbm [thread:$0]  %s242, 1920, %s240, %s221, 384, 384, 24
        $region32: #{tpu_custom_call.1} parent=23 // pred_fallthru
          _
      $region24: #{tpu_custom_call.1} parent=5 // pred_fallthru
        _
      %p248 = scmp.le.s32.totalorder 2, %s13
      // Predicated region
      $region33: #{tpu_custom_call.1} parent=5 // pred_check
        %p249 = pneg %p248
      $region34: #{tpu_custom_call.1} parent=5 // pred_check_branch
        %251 = sbr.rel (%p249) target = $region36
      $region35: #{tpu_custom_call.1} parent=5 // pred_region
        %s252 = ssub.s32 %s13, 2
        // Predicated region
        $region37: #{tpu_custom_call.1} parent=35 // pred_check
          %p253 = pneg %p106
        $region38: #{tpu_custom_call.1} parent=35 // pred_check_branch
          %255 = sbr.rel (%p253) target = $region40
        $region39: #{tpu_custom_call.1} parent=35 // pred_region
          %s256 = sand.u32 %s91, 1
          %s257 = scalar_lea.sflag [#allocation4], %s256
          %s258 = sand.u32 %s91, 1
          %s259 = smul.addr %s258, 120
          %s260 = scalar_lea.vmem [#allocation5], %s259
          %261 = dma.done %s257, 1920
        $region40: #{tpu_custom_call.1} parent=35 // pred_fallthru
          _
      $region36: #{tpu_custom_call.1} parent=5 // pred_fallthru
        _
    $region6: #{tpu_custom_call.1} parent=1 // loop_footer
      %s17 = sadd.s32 1, %s13
    $region7: #{tpu_custom_call.1} parent=1 // loop_footer_branch
      %12 = sbr.rel target = $region3
    $region8: #{tpu_custom_call.1} parent=1 // loop_exit
      _
    %262 = vsyncpa [#allocation3], 1
    %s263 = scalar_lea.sflag [#allocation3], 1
    %264 = vsyncpa %s263, 1
    %265 = vsyncpa [#allocation4], 1
    %s266 = scalar_lea.sflag [#allocation4], 1
    %267 = vsyncpa %s266, 1

</llo_original>
